<compile_context>
chip_gen: v7x
topology: tpu7x:2x2x1
jax: 0.10.0
libtpu: 0.0.40
codegen_flags: <defaults>
</compile_context>

<pallas_src>
import functools

import jax
import jax.numpy as jnp
from jax.experimental import pallas as pl
from jax.experimental.pallas import tpu as pltpu

_LANE = 128


def _decomp_kernel(x_ref, res_ref, mean_ref, *, kernel_size: int):
    """x_ref: (T, L) tile — time along sublanes, (batch*)feature along lanes."""
    x = x_ref[...]
    T = x.shape[0]
    pad = (kernel_size - 1) // 2
    inv_k = 1.0 / kernel_size

    if pad == 0:
        mean_ref[...] = x
        res_ref[...] = x - x
        return

    xf = x.astype(jnp.float32)  # cast once (matters for bf16 inputs)

    if 2 * pad >= T:
        # Degenerate path: window spans the whole tile.  Use the fully masked
        # per-tap formula (correct for any pad); cost is irrelevant at tiny T.
        row = jax.lax.broadcasted_iota(jnp.int32, x.shape, 0)
        first = xf[0:1, :]
        last = xf[T - 1:T, :]
        acc = jnp.zeros(x.shape, jnp.float32)
        for d in range(-pad, pad + 1):
            if d == 0:
                term = xf
            else:
                s = (-d) % T
                shifted = xf if s == 0 else pltpu.roll(xf, shift=s, axis=0)
                if d > 0:
                    term = jnp.where(row < T - d, shifted, last)
                else:
                    term = jnp.where(row >= -d, shifted, first)
            acc = acc + term
        mean = (acc * inv_k).astype(x.dtype)
        mean_ref[...] = mean
        res_ref[...] = x - mean
        return

    # ---- Main path: unmasked roll-accumulate + edge-row-only fixup. ----
    # Interior rows (pad <= t < T - pad) never wrap, so no masking is needed.
    acc = xf
    for d in range(1, pad + 1):
        acc = acc + pltpu.roll(xf, shift=T - d, axis=0)  # x[(t + d) mod T]
        acc = acc + pltpu.roll(xf, shift=d, axis=0)      # x[(t - d) mod T]
    mean = (acc * inv_k).astype(x.dtype)
    mean_ref[...] = mean
    res_ref[...] = x - mean

    # Replicate-padding fixup for the first / last `pad` rows only.
    # O(pad) single-row (1, L) adds and masked row stores — negligible vs T.
    x0 = xf[0:1, :]
    xl = xf[T - 1:T, :]

    prefix = x0                       # running sum_{j=0..jp} x[j]
    jp = 0
    for t in range(pad):
        while jp < t + pad:
            jp += 1
            prefix = prefix + xf[jp:jp + 1, :]
        m = ((prefix + float(pad - t) * x0) * inv_k).astype(x.dtype)
        mean_ref[t:t + 1, :] = m
        res_ref[t:t + 1, :] = x[t:t + 1, :] - m

    suffix = xl                       # running sum_{j=js..T-1} x[j]
    js = T - 1
    for tt in range(pad):
        t = T - 1 - tt
        while js > t - pad:
            js -= 1
            suffix = suffix + xf[js:js + 1, :]
        m = ((suffix + float(t + pad - (T - 1)) * xl) * inv_k).astype(x.dtype)
        mean_ref[t:t + 1, :] = m
        res_ref[t:t + 1, :] = x[t:t + 1, :] - m


def _vmem_budget_and_limit():
    """Per-generation block budget and explicit scoped-VMEM limit."""
    phys = 64 << 20  # conservative default (v7x per-TensorCore VMEM)
    try:
        phys = int(getattr(pltpu.get_tpu_info(), "vmem_capacity_bytes", phys))
    except Exception:
        pass
    limit = min((phys * 3) // 4, 96 << 20)   # 96 MiB on v5e/v6e, 48 MiB on v7x
    budget = (limit * 2) // 3                # headroom for temps / double-buffer
    return budget, limit


def _pick_lane_tile(n_lanes, T, itemsize, budget, want_min_steps=1):
    """Largest multiple-of-128 divisor of n_lanes that fits the VMEM budget."""
    # Per lane column: (1 in + 2 out) x double-buffered + ~6 f32 in-kernel temps.
    per_lane = T * (6 * itemsize + 6 * 4)
    cap = max(_LANE, (budget // max(per_lane, 1)) // _LANE * _LANE)
    divisors = [m for m in range(_LANE, n_lanes + 1, _LANE) if n_lanes % m == 0]
    best = None
    for c in divisors:                       # ascending -> last match is largest
        if c <= cap and n_lanes // c >= want_min_steps:
            best = c
    if best is None:
        for c in divisors:
            if c <= cap:
                best = c
    if best is None:
        # TODO(synk): halo-tile along T (pad-row overlap) when even a 128-lane
        # full-T block exceeds the VMEM budget (very long sequences).
        best = _LANE
    return best


def series_decomp2(x: jax.Array, kernel_size: int):
    """x: (B, T, F) -> (res, moving_mean), both (B, T, F)."""
    if kernel_size < 1 or kernel_size % 2 != 1:
        # AvgPool1d with replicate padding only preserves length for odd K.
        raise ValueError("series_decomp2 requires a positive odd kernel_size")
    B, T, F = x.shape
    itemsize = jnp.dtype(x.dtype).itemsize
    kernel = functools.partial(_decomp_kernel, kernel_size=kernel_size)
    budget, vmem_limit = _vmem_budget_and_limit()
    out_struct = jax.ShapeDtypeStruct((B, T, F), x.dtype)

    def _cost(n_elems):
        return pl.CostEstimate(
            flops=(kernel_size + 2) * n_elems,
            transcendentals=0,
            bytes_accessed=3 * n_elems * itemsize,
        )

    if F % _LANE == 0:
        # Path A: feature axis already lane-dense — tile it, grid over (B, F tiles).
        want_min_steps = 2 if B == 1 else 1   # keep both v7x TensorCores busy
        f_tile = _pick_lane_tile(F, T, itemsize, budget, want_min_steps)
        spec = pl.BlockSpec((None, T, f_tile), lambda b, j: (b, 0, j))
        res, mean = pl.pallas_call(
            kernel,
            out_shape=(out_struct, out_struct),
            grid=(B, F // f_tile),
            in_specs=[spec],
            out_specs=(spec, spec),
            compiler_params=pltpu.CompilerParams(
                dimension_semantics=("parallel", "parallel"),
                vmem_limit_bytes=vmem_limit,
            ),
            cost_estimate=_cost(B * T * F),
        )(x)
        return res, mean

    if F >= 64:
        # Path B: moderate, non-128-aligned F — keep (B, T, F), one full-extent
        # (T, F) block per batch (legal since it equals the array dims).  Masked
        # lane stores in-kernel beat the extra HBM round-trips of wrapper
        # transpose/reshape on this memory-bound op.
        spec = pl.BlockSpec((None, T, F), lambda b: (b, 0, 0))
        res, mean = pl.pallas_call(
            kernel,
            out_shape=(out_struct, out_struct),
            grid=(B,),
            in_specs=[spec],
            out_specs=(spec, spec),
            compiler_params=pltpu.CompilerParams(
                dimension_semantics=("parallel",),
                vmem_limit_bytes=vmem_limit,
            ),
            cost_estimate=_cost(B * T * F),
        )(x)
        return res, mean

    # Path C: genuinely tiny F — fold (B, F) into the lane axis so loads/stores
    # are lane-dense.  The moving average is along T only, so every (b, f)
    # column is independent and this is exact.
    N = B * F
    n_pad = ((N + _LANE - 1) // _LANE) * _LANE
    x2 = jnp.transpose(x, (1, 0, 2)).reshape(T, N)
    if n_pad != N:
        x2 = jnp.pad(x2, ((0, 0), (0, n_pad - N)))
    want_min_steps = 2 if n_pad >= 2 * _LANE else 1
    f_tile = _pick_lane_tile(n_pad, T, itemsize, budget, want_min_steps)
    spec = pl.BlockSpec((T, f_tile), lambda j: (0, j))
    out2 = jax.ShapeDtypeStruct((T, n_pad), x.dtype)
    res2, mean2 = pl.pallas_call(
        kernel,
        out_shape=(out2, out2),
        grid=(n_pad // f_tile,),
        in_specs=[spec],
        out_specs=(spec, spec),
        compiler_params=pltpu.CompilerParams(
            dimension_semantics=("parallel",),
            vmem_limit_bytes=vmem_limit,
        ),
        cost_estimate=_cost(T * n_pad),
    )(x2)
    res = res2[:, :N].reshape(T, B, F).transpose(1, 0, 2)
    mean = mean2[:, :N].reshape(T, B, F).transpose(1, 0, 2)
    return res, mean


def _reference(x, kernel_size):
    # Pure-JAX reference mirroring the PyTorch forward.
    pad = (kernel_size - 1) // 2
    front = jnp.repeat(x[:, 0:1, :], pad, axis=1)
    end = jnp.repeat(x[:, -1:, :], pad, axis=1)
    xp = jnp.concatenate([front, x, end], axis=1)  # (B, T + 2*pad, F)
    T = x.shape[1]
    windows = jnp.stack([xp[:, j:j + T, :] for j in range(kernel_size)], axis=0)
    mean = jnp.mean(windows.astype(jnp.float32), axis=0).astype(x.dtype)
    return x - mean, mean


if __name__ == "__main__":
    key = jax.random.PRNGKey(0)
    k0, k1, k2, k3 = jax.random.split(key, 4)

    cases = [
        ((2, 16, 8), 5, k0),     # tiny F          -> lane-fold path
        ((2, 16, 64), 5, k1),    # mid, unaligned F -> per-batch full-extent path
        ((2, 16, 128), 5, k2),   # 128-aligned F   -> feature-tiled path
        ((1, 8, 8), 17, k3),     # window >= T     -> degenerate replicate path
    ]
    for shape, K, kk in cases:
        x = jax.random.normal(kk, shape, dtype=jnp.float32)
        res, mean = jax.block_until_ready(series_decomp2(x, K))
        res_ref, mean_ref = _reference(x, K)
        assert jnp.allclose(mean, mean_ref, atol=1e-5, rtol=1e-5), (shape, K)
        assert jnp.allclose(res, res_ref, atol=1e-5, rtol=1e-5), (shape, K)

    print("KERNEL_OK")
</pallas_src>

<mosaic_0001>
module attributes {stable_mosaic.version = 11 : i64} {
  func.func @_decomp_kernel(%arg0: i32, %arg1: memref<16x128xf32, #tpu.memory_space<vmem>>, %arg2: memref<16x128xf32, #tpu.memory_space<vmem>>, %arg3: memref<16x128xf32, #tpu.memory_space<vmem>>) attributes {dimension_semantics = [#tpu.dimension_semantics<parallel>], iteration_bounds = array<i64: 1>, scalar_prefetch = 0 : i64, scratch_operands = 0 : i64, tpu.core_type = #tpu.core_type<tc>, window_params = [{transform_indices = @transform_0, window_bounds = array<i64: 16, 128>}, {transform_indices = @transform_1, window_bounds = array<i64: 16, 128>}, {transform_indices = @transform_2, window_bounds = array<i64: 16, 128>}]} {
    %c0 = arith.constant 0 : index
    %c0_0 = arith.constant 0 : index
    %0 = vector.load %arg1[%c0, %c0_0] : memref<16x128xf32, #tpu.memory_space<vmem>>, vector<16x128xf32>
    %c15_i32 = arith.constant 15 : i32
    %1 = tpu.dynamic_rotate %0 by %c15_i32 dim 0 : vector<16x128xf32>, i32 -> vector<16x128xf32>
    %2 = arith.addf %0, %1 : vector<16x128xf32>
    %c1_i32 = arith.constant 1 : i32
    %3 = tpu.dynamic_rotate %0 by %c1_i32 dim 0 : vector<16x128xf32>, i32 -> vector<16x128xf32>
    %4 = arith.addf %2, %3 : vector<16x128xf32>
    %c14_i32 = arith.constant 14 : i32
    %5 = tpu.dynamic_rotate %0 by %c14_i32 dim 0 : vector<16x128xf32>, i32 -> vector<16x128xf32>
    %6 = arith.addf %4, %5 : vector<16x128xf32>
    %c2_i32 = arith.constant 2 : i32
    %7 = tpu.dynamic_rotate %0 by %c2_i32 dim 0 : vector<16x128xf32>, i32 -> vector<16x128xf32>
    %8 = arith.addf %6, %7 : vector<16x128xf32>
    %cst = arith.constant 2.000000e-01 : f32
    %9 = vector.broadcast %cst : f32 to vector<16x128xf32>
    %10 = arith.mulf %8, %9 : vector<16x128xf32>
    %c0_1 = arith.constant 0 : index
    %c0_2 = arith.constant 0 : index
    %11 = vector.load %arg3[%c0_1, %c0_2] : memref<16x128xf32, #tpu.memory_space<vmem>>, vector<16x128xf32>
    tpu.vector_store %arg3[%c0_1, %c0_2], %10 {strides = array<i32>} : memref<16x128xf32, #tpu.memory_space<vmem>>, vector<16x128xf32>,
    %12 = arith.subf %0, %10 : vector<16x128xf32>
    %c0_3 = arith.constant 0 : index
    %c0_4 = arith.constant 0 : index
    %13 = vector.load %arg2[%c0_3, %c0_4] : memref<16x128xf32, #tpu.memory_space<vmem>>, vector<16x128xf32>
    tpu.vector_store %arg2[%c0_3, %c0_4], %12 {strides = array<i32>} : memref<16x128xf32, #tpu.memory_space<vmem>>, vector<16x128xf32>,
    %14 = vector.extract_strided_slice %0 {offsets = [0, 0], sizes = [1, 128], strides = [1, 1]} : vector<16x128xf32> to vector<1x128xf32>
    %15 = vector.extract_strided_slice %0 {offsets = [15, 0], sizes = [1, 128], strides = [1, 1]} : vector<16x128xf32> to vector<1x128xf32>
    %16 = vector.extract_strided_slice %0 {offsets = [1, 0], sizes = [1, 128], strides = [1, 1]} : vector<16x128xf32> to vector<1x128xf32>
    %17 = arith.addf %14, %16 : vector<1x128xf32>
    %18 = vector.extract_strided_slice %0 {offsets = [2, 0], sizes = [1, 128], strides = [1, 1]} : vector<16x128xf32> to vector<1x128xf32>
    %19 = arith.addf %17, %18 : vector<1x128xf32>
    %cst_5 = arith.constant 2.000000e+00 : f32
    %20 = vector.broadcast %cst_5 : f32 to vector<1x128xf32>
    %21 = arith.mulf %20, %14 : vector<1x128xf32>
    %22 = arith.addf %19, %21 : vector<1x128xf32>
    %cst_6 = arith.constant 2.000000e-01 : f32
    %23 = vector.broadcast %cst_6 : f32 to vector<1x128xf32>
    %24 = arith.mulf %22, %23 : vector<1x128xf32>
    %c0_7 = arith.constant 0 : index
    %c0_8 = arith.constant 0 : index
    %25 = vector.load %arg3[%c0_7, %c0_8] : memref<16x128xf32, #tpu.memory_space<vmem>>, vector<1x128xf32>
    tpu.vector_store %arg3[%c0_7, %c0_8], %24 {strides = array<i32>} : memref<16x128xf32, #tpu.memory_space<vmem>>, vector<1x128xf32>,
    %26 = vector.extract_strided_slice %0 {offsets = [0, 0], sizes = [1, 128], strides = [1, 1]} : vector<16x128xf32> to vector<1x128xf32>
    %27 = arith.subf %26, %24 : vector<1x128xf32>
    %c0_9 = arith.constant 0 : index
    %c0_10 = arith.constant 0 : index
    %28 = vector.load %arg2[%c0_9, %c0_10] : memref<16x128xf32, #tpu.memory_space<vmem>>, vector<1x128xf32>
    tpu.vector_store %arg2[%c0_9, %c0_10], %27 {strides = array<i32>} : memref<16x128xf32, #tpu.memory_space<vmem>>, vector<1x128xf32>,
    %29 = vector.extract_strided_slice %0 {offsets = [3, 0], sizes = [1, 128], strides = [1, 1]} : vector<16x128xf32> to vector<1x128xf32>
    %30 = arith.addf %19, %29 : vector<1x128xf32>
    %cst_11 = arith.constant 1.000000e+00 : f32
    %31 = vector.broadcast %cst_11 : f32 to vector<1x128xf32>
    %32 = arith.mulf %31, %14 : vector<1x128xf32>
    %33 = arith.addf %30, %32 : vector<1x128xf32>
    %cst_12 = arith.constant 2.000000e-01 : f32
    %34 = vector.broadcast %cst_12 : f32 to vector<1x128xf32>
    %35 = arith.mulf %33, %34 : vector<1x128xf32>
    %c1 = arith.constant 1 : index
    %c0_13 = arith.constant 0 : index
    %36 = vector.load %arg3[%c1, %c0_13] : memref<16x128xf32, #tpu.memory_space<vmem>>, vector<1x128xf32>
    tpu.vector_store %arg3[%c1, %c0_13], %35 {strides = array<i32>} : memref<16x128xf32, #tpu.memory_space<vmem>>, vector<1x128xf32>,
    %37 = vector.extract_strided_slice %0 {offsets = [1, 0], sizes = [1, 128], strides = [1, 1]} : vector<16x128xf32> to vector<1x128xf32>
    %38 = arith.subf %37, %35 : vector<1x128xf32>
    %c1_14 = arith.constant 1 : index
    %c0_15 = arith.constant 0 : index
    %39 = vector.load %arg2[%c1_14, %c0_15] : memref<16x128xf32, #tpu.memory_space<vmem>>, vector<1x128xf32>
    tpu.vector_store %arg2[%c1_14, %c0_15], %38 {strides = array<i32>} : memref<16x128xf32, #tpu.memory_space<vmem>>, vector<1x128xf32>,
    %40 = vector.extract_strided_slice %0 {offsets = [14, 0], sizes = [1, 128], strides = [1, 1]} : vector<16x128xf32> to vector<1x128xf32>
    %41 = arith.addf %15, %40 : vector<1x128xf32>
    %42 = vector.extract_strided_slice %0 {offsets = [13, 0], sizes = [1, 128], strides = [1, 1]} : vector<16x128xf32> to vector<1x128xf32>
    %43 = arith.addf %41, %42 : vector<1x128xf32>
    %cst_16 = arith.constant 2.000000e+00 : f32
    %44 = vector.broadcast %cst_16 : f32 to vector<1x128xf32>
    %45 = arith.mulf %44, %15 : vector<1x128xf32>
    %46 = arith.addf %43, %45 : vector<1x128xf32>
    %cst_17 = arith.constant 2.000000e-01 : f32
    %47 = vector.broadcast %cst_17 : f32 to vector<1x128xf32>
    %48 = arith.mulf %46, %47 : vector<1x128xf32>
    %c15 = arith.constant 15 : index
    %c0_18 = arith.constant 0 : index
    %49 = vector.load %arg3[%c15, %c0_18] : memref<16x128xf32, #tpu.memory_space<vmem>>, vector<1x128xf32>
    tpu.vector_store %arg3[%c15, %c0_18], %48 {strides = array<i32>} : memref<16x128xf32, #tpu.memory_space<vmem>>, vector<1x128xf32>,
    %50 = vector.extract_strided_slice %0 {offsets = [15, 0], sizes = [1, 128], strides = [1, 1]} : vector<16x128xf32> to vector<1x128xf32>
    %51 = arith.subf %50, %48 : vector<1x128xf32>
    %c15_19 = arith.constant 15 : index
    %c0_20 = arith.constant 0 : index
    %52 = vector.load %arg2[%c15_19, %c0_20] : memref<16x128xf32, #tpu.memory_space<vmem>>, vector<1x128xf32>
    tpu.vector_store %arg2[%c15_19, %c0_20], %51 {strides = array<i32>} : memref<16x128xf32, #tpu.memory_space<vmem>>, vector<1x128xf32>,
    %53 = vector.extract_strided_slice %0 {offsets = [12, 0], sizes = [1, 128], strides = [1, 1]} : vector<16x128xf32> to vector<1x128xf32>
    %54 = arith.addf %43, %53 : vector<1x128xf32>
    %cst_21 = arith.constant 1.000000e+00 : f32
    %55 = vector.broadcast %cst_21 : f32 to vector<1x128xf32>
    %56 = arith.mulf %55, %15 : vector<1x128xf32>
    %57 = arith.addf %54, %56 : vector<1x128xf32>
    %cst_22 = arith.constant 2.000000e-01 : f32
    %58 = vector.broadcast %cst_22 : f32 to vector<1x128xf32>
    %59 = arith.mulf %57, %58 : vector<1x128xf32>
    %c14 = arith.constant 14 : index
    %c0_23 = arith.constant 0 : index
    %60 = vector.load %arg3[%c14, %c0_23] : memref<16x128xf32, #tpu.memory_space<vmem>>, vector<1x128xf32>
    tpu.vector_store %arg3[%c14, %c0_23], %59 {strides = array<i32>} : memref<16x128xf32, #tpu.memory_space<vmem>>, vector<1x128xf32>,
    %61 = vector.extract_strided_slice %0 {offsets = [14, 0], sizes = [1, 128], strides = [1, 1]} : vector<16x128xf32> to vector<1x128xf32>
    %62 = arith.subf %61, %59 : vector<1x128xf32>
    %c14_24 = arith.constant 14 : index
    %c0_25 = arith.constant 0 : index
    %63 = vector.load %arg2[%c14_24, %c0_25] : memref<16x128xf32, #tpu.memory_space<vmem>>, vector<1x128xf32>
    tpu.vector_store %arg2[%c14_24, %c0_25], %62 {strides = array<i32>} : memref<16x128xf32, #tpu.memory_space<vmem>>, vector<1x128xf32>,
    return
  }
  func.func @transform_0(%arg0: i32) -> (i32, i32) {
    %c0_i32 = arith.constant 0 : i32
    %c0_i32_0 = arith.constant 0 : i32
    return %c0_i32, %arg0 : i32, i32
  }
  func.func @transform_1(%arg0: i32) -> (i32, i32) {
    %c0_i32 = arith.constant 0 : i32
    %c0_i32_0 = arith.constant 0 : i32
    return %c0_i32, %arg0 : i32, i32
  }
  func.func @transform_2(%arg0: i32) -> (i32, i32) {
    %c0_i32 = arith.constant 0 : i32
    %c0_i32_0 = arith.constant 0 : i32
    return %c0_i32, %arg0 : i32, i32
  }
}

</mosaic_0001>

<llo_original>
// kernel: tpu_custom_call.1
$region0: #{tpu_custom_call.1}
  #allocation0 [shape = 'u32[]', space=smem, size = 0x4, offset = 0x4, fixed_abs, tag = 'smem constant byte address 0x4 - core index']
  #allocation1 [shape = 'u32[144,128]{1,0:T(1,128)}', space=vmem, size = 0x12000, scoped, tag = 'internal scratch']
  %s0 = inlined_call_operand.hbm [shape: f32[16,128], index: 0, kind: input, shape index: {}]
  %s1 = inlined_call_operand.hbm [shape: f32[16,128], index: 1, kind: output, shape index: {0}]
  %s2 = inlined_call_operand.hbm [shape: f32[16,128], index: 2, kind: output, shape index: {1}]
  %3 = xla_tuple %s1, %s2
  %s4 = sld [smem:[#allocation0]]
  $region26: #{tpu_custom_call.1} parent=0
    _
  %s6 = ssub.s32 1, %s4
  %s7 = scalar_select 0, %s6, %s4
  $region1: #{tpu_custom_call.1} parent=0
    #allocation2 [shape = 'u8[8192]{0}', space=vmem, size = 0x2000, scoped, tag = 'input window, operand 0, single buffered']
    #allocation3 [shape = 's32[1]{0}', space=sflag, size = 0x4, scoped, tag = 'scoped memory for tpu_custom_call.1']
    #allocation4 [shape = 's32[1]{0}', space=sflag, size = 0x4, scoped, tag = 'scoped memory for tpu_custom_call.1']
    #allocation5 [shape = 'u8[8192]{0}', space=vmem, size = 0x2000, scoped, tag = 'output window, operand 0, single buffered']
    #allocation6 [shape = 'u8[8192]{0}', space=vmem, size = 0x2000, scoped, tag = 'output window, operand 1, single buffered']
    #allocation7 [shape = 's32[1]{0}', space=sflag, size = 0x4, scoped, tag = 'scoped memory for tpu_custom_call.1']
    %8 = vsyncpa [#allocation3], 0
    %9 = vsyncpa [#allocation4], 0
    %10 = vsyncpa [#allocation7], 0
    // Predicated region
    $region2: #{tpu_custom_call.1} parent=1 // pred_check
      _
    $region3: #{tpu_custom_call.1} parent=1 // pred_check_branch
      %12 = sbr.rel (0) target = $region5
    $region4: #{tpu_custom_call.1} parent=1 // pred_region
      %s14 = ssub.s32 256, 256
      %15 = vsyncadd [#allocation3], %s14
      %s16 = sshll.u32 [#allocation2], 4
      %s17 = int_to_ptr.vmem [resolvable:$true] %s16
      %22 = dma.hbm_to_vmem [thread:$0]  %s0, 256, %s17, [#allocation3], 128, 128, 8
    $region5: #{tpu_custom_call.1} parent=1 // pred_fallthru
      _
    // Predicated region
    $region6: #{tpu_custom_call.1} parent=1 // pred_check
      _
    $region7: #{tpu_custom_call.1} parent=1 // pred_check_branch
      %24 = sbr.rel (0) target = $region9
    $region8: #{tpu_custom_call.1} parent=1 // pred_region
      %25 = dma.done [#allocation3], 256
    $region9: #{tpu_custom_call.1} parent=1 // pred_fallthru
      _
    %v26 = vld [vmem:[#allocation2] sm:$0xff]
    %v27 = vld [vmem:[#allocation2 + $0x8] sm:$0xff]
    %v28 = vrot.slane %v26, 1
    %v29 = vrot.slane %v27, 1
    %v30 = vlaneseq
    %v31 = vshrl.u32 %v30, 7
    %vm32 = vcmp.lt.s32.totalorder %v31, 7
    %v33 = vsel %vm32, %v28, %v29
    %v34 = vsel %vm32, %v29, %v28
    %v35 = vadd.f32 %v26, %v33
    %v36 = vadd.f32 %v27, %v34
    %v37 = vrot.slane %v26, 7
    %v38 = vrot.slane %v27, 7
    %vm39 = vcmp.lt.s32.totalorder %v31, 1
    %v40 = vsel %vm39, %v37, %v38
    %v41 = vsel %vm39, %v38, %v37
    %v42 = vadd.f32 %v35, %v41
    %v43 = vadd.f32 %v36, %v40
    %v44 = vrot.slane %v26, 2
    %v45 = vrot.slane %v27, 2
    %vm46 = vcmp.lt.s32.totalorder %v31, 6
    %v47 = vsel %vm46, %v44, %v45
    %v48 = vsel %vm46, %v45, %v44
    %v49 = vadd.f32 %v42, %v47
    %v50 = vadd.f32 %v43, %v48
    %v51 = vrot.slane %v26, 6
    %v52 = vrot.slane %v27, 6
    %vm53 = vcmp.lt.s32.totalorder %v31, 2
    %v54 = vsel %vm53, %v51, %v52
    %v55 = vsel %vm53, %v52, %v51
    %v56 = vadd.f32 %v49, %v55
    %v57 = vadd.f32 %v50, %v54
    %v58 = vmul.f32 %v56, 0.2
    %v59 = vmul.f32 %v57, 0.2
    %60 = vst [vmem:[#allocation6] sm:$0xff] %v58
    %61 = vst [vmem:[#allocation6 + $0x8] sm:$0xff] %v59
    %v62 = vsub.f32 %v26, %v58
    %v63 = vsub.f32 %v27, %v59
    %64 = vst [vmem:[#allocation5] sm:$0xff] %v62
    %65 = vst [vmem:[#allocation5 + $0x8] sm:$0xff] %v63
    %v67 = vrot.slane %v26, 1
    %v69 = vadd.f32 %v26, %v67
    %v70 = vrot.slane %v26, 2
    %v72 = vadd.f32 %v69, %v70
    %v73 = vmul.f32 %v26, 2.0
    %v74 = vadd.f32 %v72, %v73
    %v75 = vmul.f32 %v74, 0.2
    %76 = vst [vmem:[#allocation6] sm:$0x1] %v75
    %v77 = vsub.f32 %v26, %v75
    %78 = vst [vmem:[#allocation5] sm:$0x1] %v77
    %v79 = vrot.slane %v26, 3
    %v81 = vadd.f32 %v72, %v79
    %v82 = vadd.f32 %v81, %v26
    %v83 = vmul.f32 %v82, 0.2
    %84 = vst [vmem:[#allocation6 + $0x1] sm:$0x1] %v83
    %v86 = vrot.slane %v83, 7
    %v88 = vsub.f32 %v26, %v86
    %89 = vst [vmem:[#allocation5] sm:$0x2] %v88
    %v91 = vrot.slane %v27, 7
    %v93 = vadd.f32 %v27, %v91
    %v94 = vrot.slane %v27, 6
    %v96 = vadd.f32 %v93, %v94
    %v97 = vmul.f32 %v27, 2.0
    %v98 = vadd.f32 %v96, %v97
    %v99 = vmul.f32 %v98, 0.2
    %100 = vst [vmem:[#allocation6 + $0x8] sm:$0x80] %v99
    %v101 = vsub.f32 %v27, %v99
    %102 = vst [vmem:[#allocation5 + $0x8] sm:$0x80] %v101
    %v103 = vrot.slane %v27, 5
    %v105 = vadd.f32 %v96, %v103
    %v106 = vadd.f32 %v105, %v27
    %v107 = vmul.f32 %v106, 0.2
    %108 = vst [vmem:[#allocation6 + $0x7] sm:$0x80] %v107
    %v110 = vrot.slane %v107, 1
    %v112 = vsub.f32 %v27, %v110
    %113 = vst [vmem:[#allocation5 + $0x8] sm:$0x40] %v112
    // Predicated region
    $region10: #{tpu_custom_call.1} parent=1 // pred_check
      _
    $region11: #{tpu_custom_call.1} parent=1 // pred_check_branch
      %115 = sbr.rel (0) target = $region13
    $region12: #{tpu_custom_call.1} parent=1 // pred_region
      %s117 = ssub.s32 256, 256
      %118 = vsyncadd [#allocation4], %s117
      %s119 = sshll.u32 [#allocation5], 4
      %s120 = int_to_ptr.vmem [resolvable:$true] %s119
      %125 = dma.vmem_to_hbm [thread:$0]  %s120, 256, %s1, [#allocation4], 128, 128, 8
    $region13: #{tpu_custom_call.1} parent=1 // pred_fallthru
      _
    // Predicated region
    $region14: #{tpu_custom_call.1} parent=1 // pred_check
      _
    $region15: #{tpu_custom_call.1} parent=1 // pred_check_branch
      %127 = sbr.rel (0) target = $region17
    $region16: #{tpu_custom_call.1} parent=1 // pred_region
      %s129 = ssub.s32 256, 256
      %130 = vsyncadd [#allocation7], %s129
      %s131 = sshll.u32 [#allocation6], 4
      %s132 = int_to_ptr.vmem [resolvable:$true] %s131
      %137 = dma.vmem_to_hbm [thread:$0]  %s132, 256, %s2, [#allocation7], 128, 128, 8
    $region17: #{tpu_custom_call.1} parent=1 // pred_fallthru
      _
    // Predicated region
    $region18: #{tpu_custom_call.1} parent=1 // pred_check
      _
    $region19: #{tpu_custom_call.1} parent=1 // pred_check_branch
      %139 = sbr.rel (0) target = $region21
    $region20: #{tpu_custom_call.1} parent=1 // pred_region
      %140 = dma.done [#allocation4], 256
    $region21: #{tpu_custom_call.1} parent=1 // pred_fallthru
      _
    // Predicated region
    $region22: #{tpu_custom_call.1} parent=1 // pred_check
      _
    $region23: #{tpu_custom_call.1} parent=1 // pred_check_branch
      %142 = sbr.rel (0) target = $region25
    $region24: #{tpu_custom_call.1} parent=1 // pred_region
      %143 = dma.done [#allocation7], 256
    $region25: #{tpu_custom_call.1} parent=1 // pred_fallthru
      _
    %144 = vsyncpa [#allocation3], 1
    %145 = vsyncpa [#allocation4], 1
    %146 = vsyncpa [#allocation7], 1

</llo_original>
